<compile_context>
chip_gen: v5e
topology: v5e:2x2
jax: 0.10.0
libtpu: 0.0.40
codegen_flags: <defaults>
</compile_context>

<pallas_src>
import math

import jax
import jax.numpy as jnp
from jax import lax
from jax.experimental import pallas as pl
from jax.experimental.pallas import tpu as pltpu

# ----- module configuration (reference defaults, num_groups forced to 1) -----
DIM_MODEL = 32
NUM_HEADS = 8
NUM_GROUPS = 1                               # see TODO(synk) above
DIM_HEADS = DIM_MODEL // NUM_HEADS           # 4
HIDDEN = DIM_HEADS * NUM_HEADS               # 32
KV_HIDDEN = HIDDEN // NUM_GROUPS             # 32 (width of each proj_kv chunk)

# dot_general dimension_numbers.
_XW_T = (((1,), (1,)), ((), ()))             # (M, C) x (F, C)      -> (M, F)   "x @ W.T"
_PROJ = (((2,), (2,)), ((0,), (0,)))         # (H, N, C) x (H, D, C) -> (H, N, D)
_QKT = (((2,), (2,)), ((0,), (0,)))          # (H, N, D) x (H, M, D) -> (H, N, M)
_PV = (((2,), (1,)), ((0,), (0,)))           # (H, N, M) x (H, M, D) -> (H, N, D)


def _fused_attention_kernel(x_ref, wq_ref, wv_ref, wo_ref, o_ref):
    """x_ref:(1,N,C)  wq_ref/wv_ref:(H,Dh,C)  wo_ref:(C,HIDDEN)  o_ref:(1,N,C)."""
    x = x_ref[0]                                                   # (N, C)
    n_seq = x.shape[0]

    # Per-head q / v projections, batched over heads on the MXU. The key half of
    # proj_kv is dead code in the reference forward and is never computed here.
    xb = jnp.broadcast_to(x, (NUM_HEADS, n_seq, x.shape[1]))       # (H, N, C)
    qh = lax.dot_general(xb, wq_ref[...], _PROJ,
                         preferred_element_type=jnp.float32)       # (H, N, Dh)
    vh = lax.dot_general(xb, wv_ref[...], _PROJ,
                         preferred_element_type=jnp.float32)       # (H, N, Dh)

    # scores = (Q Q^T) / sqrt(Dh): queries reused as keys (reference semantics),
    # all heads in one batched dot + one vectorized softmax.
    s = lax.dot_general(qh, qh, _QKT,
                        preferred_element_type=jnp.float32)        # (H, N, N)
    s = s * (1.0 / math.sqrt(DIM_HEADS))
    s = s - jnp.max(s, axis=-1, keepdims=True)
    p = jnp.exp(s)
    p = p / jnp.sum(p, axis=-1, keepdims=True)

    o = lax.dot_general(p, vh, _PV,
                        preferred_element_type=jnp.float32)        # (H, N, Dh)

    # Reference's raw row-major reshape (B,H,N,Dh) -> (B,N,HIDDEN) (no head transpose),
    # then the fused output projection -> one lane-dense (N, C) store.
    outs = o.reshape(n_seq, HIDDEN)                                # (N, HIDDEN)
    out = lax.dot_general(outs, wo_ref[...], _XW_T,
                          preferred_element_type=jnp.float32)      # (N, C)
    o_ref[0] = out.astype(o_ref.dtype)


@jax.jit
def self_attention_forward(x, wq, wkv, wo):
    """x: (B, N, C) float32. wq/wkv/wo in torch nn.Linear layout (out_features, in_features)."""
    B, N, C = x.shape
    # Head-split the projection weights on the host (cheap reshape/slice; no transposes)
    # and drop the key half of proj_kv (never consumed by the reference forward).
    wq3 = wq.reshape(NUM_HEADS, DIM_HEADS, C)                      # (H, Dh, C)
    wv3 = wkv[KV_HIDDEN:, :].reshape(NUM_HEADS, DIM_HEADS, C)      # (H, Dh, C)

    return pl.pallas_call(
        _fused_attention_kernel,
        out_shape=jax.ShapeDtypeStruct((B, N, C), x.dtype),
        grid=(B,),
        in_specs=[
            pl.BlockSpec((1, N, C), lambda b: (b, 0, 0)),
            pl.BlockSpec((NUM_HEADS, DIM_HEADS, C), lambda b: (0, 0, 0)),
            pl.BlockSpec((NUM_HEADS, DIM_HEADS, C), lambda b: (0, 0, 0)),
            pl.BlockSpec((C, HIDDEN), lambda b: (0, 0)),
        ],
        out_specs=pl.BlockSpec((1, N, C), lambda b: (b, 0, 0)),
        compiler_params=pltpu.CompilerParams(dimension_semantics=("parallel",)),
    )(x, wq3, wv3, wo)


def _reference_forward(x, wq, wkv, wo):
    """Pure-JAX re-statement of the (executable) reference semantics."""
    hp = jax.lax.Precision.HIGHEST
    B, N, _ = x.shape
    q = jnp.einsum("bnc,hc->bnh", x, wq, precision=hp)
    kv = jnp.einsum("bnc,hc->bnh", x, wkv, precision=hp)
    vals = kv[..., KV_HIDDEN:]
    qh = q.reshape(B, N, NUM_HEADS, DIM_HEADS).transpose(0, 2, 1, 3)
    vh = vals.reshape(B, -1, NUM_HEADS // NUM_GROUPS,
                      DIM_HEADS // NUM_GROUPS).transpose(0, 2, 1, 3)
    # repeat_kv with groups == 1 is the identity.
    s = jnp.einsum("bhnd,bhmd->bhnm", qh, qh, precision=hp) / math.sqrt(DIM_HEADS)
    p = jax.nn.softmax(s, axis=-1)
    o = jnp.einsum("bhnm,bhmd->bhnd", p, vh, precision=hp)
    o = o.reshape(B, N, HIDDEN)        # reference's raw reshape (no transpose back)
    return jnp.einsum("bnh,ch->bnc", o, wo, precision=hp)


if __name__ == "__main__":
    B, N = 2, 8
    key = jax.random.PRNGKey(0)
    kx, kq, kkv, ko = jax.random.split(key, 4)

    def linear_init(k, out_f, in_f):
        bound = 1.0 / math.sqrt(in_f)   # ~ torch nn.Linear default init range
        return jax.random.uniform(k, (out_f, in_f), minval=-bound, maxval=bound,
                                  dtype=jnp.float32)

    x = jax.random.normal(kx, (B, N, DIM_MODEL), dtype=jnp.float32)
    wq = linear_init(kq, HIDDEN, DIM_MODEL)              # proj_q.weight
    wkv = linear_init(kkv, 2 * KV_HIDDEN, DIM_MODEL)     # proj_kv.weight
    wo = linear_init(ko, DIM_MODEL, HIDDEN)              # proj_o.weight

    out = self_attention_forward(x, wq, wkv, wo)
    out = jax.block_until_ready(out)

    assert out.shape == (B, N, DIM_MODEL), out.shape
    ref = jax.block_until_ready(_reference_forward(x, wq, wkv, wo))
    assert jnp.allclose(out, ref, rtol=1e-3, atol=1e-3), float(jnp.max(jnp.abs(out - ref)))

    print("KERNEL_OK")
</pallas_src>

<mosaic_0001>
module attributes {stable_mosaic.version = 11 : i64} {
  func.func @_fused_attention_kernel(%arg0: i32, %arg1: memref<1x8x32xf32, #tpu.memory_space<vmem>>, %arg2: memref<8x4x32xf32, #tpu.memory_space<vmem>>, %arg3: memref<8x4x32xf32, #tpu.memory_space<vmem>>, %arg4: memref<32x32xf32, #tpu.memory_space<vmem>>, %arg5: memref<1x8x32xf32, #tpu.memory_space<vmem>>) attributes {dimension_semantics = [#tpu.dimension_semantics<parallel>], iteration_bounds = array<i64: 2>, scalar_prefetch = 0 : i64, scratch_operands = 0 : i64, tpu.core_type = #tpu.core_type<tc>, window_params = [{transform_indices = @transform_0, window_bounds = array<i64: 1, 8, 32>}, {pipeline_mode = #tpu.pipeline_mode<synchronous>, transform_indices = @transform_1, window_bounds = array<i64: 8, 4, 32>}, {pipeline_mode = #tpu.pipeline_mode<synchronous>, transform_indices = @transform_2, window_bounds = array<i64: 8, 4, 32>}, {pipeline_mode = #tpu.pipeline_mode<synchronous>, transform_indices = @transform_3, window_bounds = array<i64: 32, 32>}, {transform_indices = @transform_4, window_bounds = array<i64: 1, 8, 32>}]} {
    %c0 = arith.constant 0 : index
    %c0_0 = arith.constant 0 : index
    %c0_1 = arith.constant 0 : index
    %0 = vector.load %arg1[%c0, %c0_0, %c0_1] : memref<1x8x32xf32, #tpu.memory_space<vmem>>, vector<1x8x32xf32>
    %1 = vector.shape_cast %0 : vector<1x8x32xf32> to vector<8x32xf32>
    %2 = vector.shape_cast %1 : vector<8x32xf32> to vector<1x8x32xf32>
    %3 = vector.broadcast %2 : vector<1x8x32xf32> to vector<8x8x32xf32>
    %c0_2 = arith.constant 0 : index
    %c0_3 = arith.constant 0 : index
    %c0_4 = arith.constant 0 : index
    %4 = vector.load %arg2[%c0_2, %c0_3, %c0_4] : memref<8x4x32xf32, #tpu.memory_space<vmem>>, vector<8x4x32xf32>
    %cst = arith.constant dense<0.000000e+00> : vector<8x8x4xf32>
    %5 = tpu.matmul %3, %4, %cst {dimension_numbers = #tpu.dot_dimension_numbers<[2], [2], [1], [1], [0, 0, 0, 1, 1, 1], [0], [0]>} : vector<8x8x32xf32>, vector<8x4x32xf32>, vector<8x8x4xf32> -> vector<8x8x4xf32>
    %c0_5 = arith.constant 0 : index
    %c0_6 = arith.constant 0 : index
    %c0_7 = arith.constant 0 : index
    %6 = vector.load %arg3[%c0_5, %c0_6, %c0_7] : memref<8x4x32xf32, #tpu.memory_space<vmem>>, vector<8x4x32xf32>
    %cst_8 = arith.constant dense<0.000000e+00> : vector<8x8x4xf32>
    %7 = tpu.matmul %3, %6, %cst_8 {dimension_numbers = #tpu.dot_dimension_numbers<[2], [2], [1], [1], [0, 0, 0, 1, 1, 1], [0], [0]>} : vector<8x8x32xf32>, vector<8x4x32xf32>, vector<8x8x4xf32> -> vector<8x8x4xf32>
    %cst_9 = arith.constant dense<0.000000e+00> : vector<8x8x8xf32>
    %8 = tpu.matmul %5, %5, %cst_9 {dimension_numbers = #tpu.dot_dimension_numbers<[2], [2], [1], [1], [0, 0, 0, 1, 1, 1], [0], [0]>} : vector<8x8x4xf32>, vector<8x8x4xf32>, vector<8x8x8xf32> -> vector<8x8x8xf32>
    %cst_10 = arith.constant 5.000000e-01 : f32
    %9 = vector.broadcast %cst_10 : f32 to vector<8x8x8xf32>
    %10 = arith.mulf %8, %9 : vector<8x8x8xf32>
    %cst_11 = arith.constant dense<0xFF800000> : vector<8x8xf32>
    %11 = vector.multi_reduction <maximumf>, %10, %cst_11 [2] : vector<8x8x8xf32> to vector<8x8xf32>
    %12 = vector.shape_cast %11 : vector<8x8xf32> to vector<8x8x1xf32>
    %13 = vector.broadcast %12 : vector<8x8x1xf32> to vector<8x8x8xf32>
    %14 = arith.subf %10, %13 : vector<8x8x8xf32>
    %15 = math.exp %14 : vector<8x8x8xf32>
    %cst_12 = arith.constant dense<0.000000e+00> : vector<8x8xf32>
    %16 = vector.multi_reduction <add>, %15, %cst_12 [2] : vector<8x8x8xf32> to vector<8x8xf32>
    %17 = vector.shape_cast %16 : vector<8x8xf32> to vector<8x8x1xf32>
    %18 = vector.broadcast %17 : vector<8x8x1xf32> to vector<8x8x8xf32>
    %19 = arith.divf %15, %18 : vector<8x8x8xf32>
    %cst_13 = arith.constant dense<0.000000e+00> : vector<8x8x4xf32>
    %20 = tpu.matmul %19, %7, %cst_13 {dimension_numbers = #tpu.dot_dimension_numbers<[2], [1], [1], [2], [0, 0, 0, 1, 1, 2], [0], [0]>} : vector<8x8x8xf32>, vector<8x8x4xf32>, vector<8x8x4xf32> -> vector<8x8x4xf32>
    %21 = vector.shape_cast %20 : vector<8x8x4xf32> to vector<8x32xf32>
    %c0_14 = arith.constant 0 : index
    %c0_15 = arith.constant 0 : index
    %22 = vector.load %arg4[%c0_14, %c0_15] : memref<32x32xf32, #tpu.memory_space<vmem>>, vector<32x32xf32>
    %cst_16 = arith.constant dense<0.000000e+00> : vector<8x32xf32>
    %23 = tpu.matmul %21, %22, %cst_16 {dimension_numbers = #tpu.dot_dimension_numbers<[1], [1], [0], [0], [0, 0, 1, 0], [], []>} : vector<8x32xf32>, vector<32x32xf32>, vector<8x32xf32> -> vector<8x32xf32>
    %c0_17 = arith.constant 0 : index
    %c0_18 = arith.constant 0 : index
    %c0_19 = arith.constant 0 : index
    %24 = vector.load %arg5[%c0_17, %c0_18, %c0_19] : memref<1x8x32xf32, #tpu.memory_space<vmem>>, vector<1x8x32xf32>
    %25 = vector.shape_cast %24 : vector<1x8x32xf32> to vector<8x32xf32>
    %26 = vector.shape_cast %23 : vector<8x32xf32> to vector<1x8x32xf32>
    tpu.vector_store %arg5[%c0_17, %c0_18, %c0_19], %26 {strides = array<i32>} : memref<1x8x32xf32, #tpu.memory_space<vmem>>, vector<1x8x32xf32>,
    return
  }
  func.func @transform_0(%arg0: i32) -> (i32, i32, i32) {
    %c0_i32 = arith.constant 0 : i32
    %c0_i32_0 = arith.constant 0 : i32
    %c0_i32_1 = arith.constant 0 : i32
    return %arg0, %c0_i32, %c0_i32_0 : i32, i32, i32
  }
  func.func @transform_1(%arg0: i32) -> (i32, i32, i32) {
    %c0_i32 = arith.constant 0 : i32
    %c0_i32_0 = arith.constant 0 : i32
    %c0_i32_1 = arith.constant 0 : i32
    %c0_i32_2 = arith.constant 0 : i32
    return %c0_i32, %c0_i32_0, %c0_i32_1 : i32, i32, i32
  }
  func.func @transform_2(%arg0: i32) -> (i32, i32, i32) {
    %c0_i32 = arith.constant 0 : i32
    %c0_i32_0 = arith.constant 0 : i32
    %c0_i32_1 = arith.constant 0 : i32
    %c0_i32_2 = arith.constant 0 : i32
    return %c0_i32, %c0_i32_0, %c0_i32_1 : i32, i32, i32
  }
  func.func @transform_3(%arg0: i32) -> (i32, i32) {
    %c0_i32 = arith.constant 0 : i32
    %c0_i32_0 = arith.constant 0 : i32
    %c0_i32_1 = arith.constant 0 : i32
    return %c0_i32, %c0_i32_0 : i32, i32
  }
  func.func @transform_4(%arg0: i32) -> (i32, i32, i32) {
    %c0_i32 = arith.constant 0 : i32
    %c0_i32_0 = arith.constant 0 : i32
    %c0_i32_1 = arith.constant 0 : i32
    return %arg0, %c0_i32, %c0_i32_0 : i32, i32, i32
  }
}

</mosaic_0001>

<llo_original>
// kernel: self_attention_forward.1
$region0: #{self_attention_forward.1}
  #allocation0 [shape = 'u32[]', space=smem, size = 0x4, offset = 0x4, fixed_abs, tag = 'smem constant byte address 0x4 - core index']
  #allocation1 [shape = 'u32[72,128]{1,0:T(1,128)}', space=vmem, size = 0x9000, scoped, tag = 'internal scratch']
  %s0 = inlined_call_operand.vmem [shape: f32[2,8,32], index: 0, kind: input, shape index: {}]
  %s1 = inlined_call_operand.vmem [shape: f32[8,4,32], index: 1, kind: input, shape index: {}]
  %s2 = inlined_call_operand.vmem [shape: f32[8,4,32], index: 2, kind: input, shape index: {}]
  %s3 = inlined_call_operand.vmem [shape: f32[32,32], index: 3, kind: input, shape index: {}]
  %s4 = inlined_call_operand.hbm [shape: f32[2,8,32], index: 4, kind: output, shape index: {}]
  %s5 = sld [smem:[#allocation0]]
  $region49: #{self_attention_forward.1} parent=0
    _
  %s7 = ssub.s32 1, %s5
  %s8 = scalar_select 0, %s7, %s5
  $region1: #{self_attention_forward.1} parent=0
    #allocation2 [shape = 'u8[8192]{0}', space=vmem, size = 0x2000, scoped, tag = 'output window, operand 0']
    #allocation3 [shape = 's32[2]{0}', space=sflag, size = 0x8, scoped, tag = 'scoped memory for self_attention_forward.1']
    %9 = vsyncpa [#allocation3], 0
    %s10 = scalar_lea.sflag [#allocation3], 1
    %11 = vsyncpa %s10, 0
    loop: start=0, step=1, limit=4
    $region2: #{self_attention_forward.1} parent=1 // loop_pre_header
      _
    $region3: #{self_attention_forward.1} parent=1 // loop_header
      %s13 = sphi 0, %s17
      %p14 = scmp.ge.s32.totalorder %s13, 4
      %s23 = sphi 0, %s25
      %s26 = sphi 0, %s23
      %s27 = sphi 0, %s26
      %s43 = sphi 0, %s27
      %s47 = sphi 0, %s47
      %s49 = sphi 0, %s47
      %s50 = sphi 0, %s49
      %s64 = sphi 0, %s50
      %s68 = sphi 0, %s68
      %s70 = sphi 0, %s68
      %s71 = sphi 0, %s70
      %s85 = sphi 0, %s71
      %s89 = sphi 0, %s89
      %s91 = sphi 0, %s89
      %s92 = sphi 0, %s91
      %s106 = sphi 0, %s92
      %s112 = sphi 0, %s114
      %s115 = sphi 0, %s112
      %s116 = sphi 0, %s115
      %s132 = sphi 0, %s116
    $region4: #{self_attention_forward.1} parent=1 // loop_header_branch
      %16 = sbr.rel (%p14) target = $region8
    $region5: #{self_attention_forward.1} parent=1 // loop_body
      %s18 = ssub.s32 %s13, 1
      %s19 = ssub.s32 %s13, 2
      %s20 = sadd.s32 %s13, 1
      %s21 = ssub.s32 %s13, %s20
      %p22 = scmp.eq.s32.totalorder %s21, 0
      %s24 = sadd.s32 %s23, 1
      %s25 = scalar_select %p22, %s23, %s24
      %p28 = pneg %p22
      %p29 = scmp.eq.s32.totalorder %s13, 1
      %p30 = por %p28, %p29
      %p31 = scmp.ne.s32.totalorder %s23, %s26
      %p32 = scmp.eq.s32.totalorder %s13, 0
      %p33 = por %p31, %p32
      %p34 = scmp.ne.s32.totalorder %s23, %s26
      %p35 = scmp.eq.s32.totalorder %s18, 1
      %p36 = por %p34, %p35
      %p37 = scmp.ne.s32.totalorder %s26, %s27
      %p38 = scmp.eq.s32.totalorder %s18, 0
      %p39 = por %p37, %p38
      %p40 = scmp.ne.s32.totalorder %s26, %s27
      %p41 = scmp.eq.s32.totalorder %s19, 1
      %p42 = por %p40, %p41
      %p44 = scmp.ne.s32.totalorder %s27, %s43
      %p45 = scmp.eq.s32.totalorder %s19, 0
      %p46 = por %p44, %p45
      %s48 = sadd.s32 %s47, 1
      %p51 = scmp.eq.s32.totalorder %s13, 1
      %p52 = scmp.ne.s32.totalorder %s47, %s49
      %p53 = scmp.eq.s32.totalorder %s13, 0
      %p54 = por %p52, %p53
      %p55 = scmp.ne.s32.totalorder %s47, %s49
      %p56 = scmp.eq.s32.totalorder %s18, 1
      %p57 = por %p55, %p56
      %p58 = scmp.ne.s32.totalorder %s49, %s50
      %p59 = scmp.eq.s32.totalorder %s18, 0
      %p60 = por %p58, %p59
      %p61 = scmp.ne.s32.totalorder %s49, %s50
      %p62 = scmp.eq.s32.totalorder %s19, 1
      %p63 = por %p61, %p62
      %p65 = scmp.ne.s32.totalorder %s50, %s64
      %p66 = scmp.eq.s32.totalorder %s19, 0
      %p67 = por %p65, %p66
      %s69 = sadd.s32 %s68, 1
      %p72 = scmp.eq.s32.totalorder %s13, 1
      %p73 = scmp.ne.s32.totalorder %s68, %s70
      %p74 = scmp.eq.s32.totalorder %s13, 0
      %p75 = por %p73, %p74
      %p76 = scmp.ne.s32.totalorder %s68, %s70
      %p77 = scmp.eq.s32.totalorder %s18, 1
      %p78 = por %p76, %p77
      %p79 = scmp.ne.s32.totalorder %s70, %s71
      %p80 = scmp.eq.s32.totalorder %s18, 0
      %p81 = por %p79, %p80
      %p82 = scmp.ne.s32.totalorder %s70, %s71
      %p83 = scmp.eq.s32.totalorder %s19, 1
      %p84 = por %p82, %p83
      %p86 = scmp.ne.s32.totalorder %s71, %s85
      %p87 = scmp.eq.s32.totalorder %s19, 0
      %p88 = por %p86, %p87
      %s90 = sadd.s32 %s89, 1
      %p93 = scmp.eq.s32.totalorder %s13, 1
      %p94 = scmp.ne.s32.totalorder %s89, %s91
      %p95 = scmp.eq.s32.totalorder %s13, 0
      %p96 = por %p94, %p95
      %p97 = scmp.ne.s32.totalorder %s89, %s91
      %p98 = scmp.eq.s32.totalorder %s18, 1
      %p99 = por %p97, %p98
      %p100 = scmp.ne.s32.totalorder %s91, %s92
      %p101 = scmp.eq.s32.totalorder %s18, 0
      %p102 = por %p100, %p101
      %p103 = scmp.ne.s32.totalorder %s91, %s92
      %p104 = scmp.eq.s32.totalorder %s19, 1
      %p105 = por %p103, %p104
      %p107 = scmp.ne.s32.totalorder %s92, %s106
      %p108 = scmp.eq.s32.totalorder %s19, 0
      %p109 = por %p107, %p108
      %s110 = ssub.s32 %s13, %s20
      %p111 = scmp.eq.s32.totalorder %s110, 0
      %s113 = sadd.s32 %s112, 1
      %s114 = scalar_select %p111, %s112, %s113
      %p117 = pneg %p111
      %p118 = scmp.eq.s32.totalorder %s13, 1
      %p119 = por %p117, %p118
      %p120 = scmp.ne.s32.totalorder %s112, %s115
      %p121 = scmp.eq.s32.totalorder %s13, 0
      %p122 = por %p120, %p121
      %p123 = scmp.ne.s32.totalorder %s112, %s115
      %p124 = scmp.eq.s32.totalorder %s18, 1
      %p125 = por %p123, %p124
      %p126 = scmp.ne.s32.totalorder %s115, %s116
      %p127 = scmp.eq.s32.totalorder %s18, 0
      %p128 = por %p126, %p127
      %p129 = scmp.ne.s32.totalorder %s115, %s116
      %p130 = scmp.eq.s32.totalorder %s19, 1
      %p131 = por %p129, %p130
      %p133 = scmp.ne.s32.totalorder %s116, %s132
      %p134 = scmp.eq.s32.totalorder %s19, 0
      %p135 = por %p133, %p134
      %p136 = scmp.le.s32.totalorder 1, %s13
      %p137 = scmp.lt.s32.totalorder %s13, 3
      %p138 = pnand %p136, %p137
      %p139 = pneg %p138
      // Predicated region
      $region9: #{self_attention_forward.1} parent=5 // pred_check
        _
      $region10: #{self_attention_forward.1} parent=5 // pred_check_branch
        %141 = sbr.rel (%p138) target = $region12
      $region11: #{self_attention_forward.1} parent=5 // pred_region
        %s142 = ssub.s32 %s13, 1
        // Predicated region
        $region13: #{self_attention_forward.1} parent=11 // pred_check
          %p143 = pneg %p60
        $region14: #{self_attention_forward.1} parent=11 // pred_check_branch
          %145 = sbr.rel (%p143) target = $region16
        $region15: #{self_attention_forward.1} parent=11 // pred_region
          _
        $region16: #{self_attention_forward.1} parent=11 // pred_fallthru
          _
        // Predicated region
        $region17: #{self_attention_forward.1} parent=11 // pred_check
          %p146 = pneg %p81
        $region18: #{self_attention_forward.1} parent=11 // pred_check_branch
          %148 = sbr.rel (%p146) target = $region20
        $region19: #{self_attention_forward.1} parent=11 // pred_region
          _
        $region20: #{self_attention_forward.1} parent=11 // pred_fallthru
          _
        // Predicated region
        $region21: #{self_attention_forward.1} parent=11 // pred_check
          %p149 = pneg %p102
        $region22: #{self_attention_forward.1} parent=11 // pred_check_branch
          %151 = sbr.rel (%p149) target = $region24
        $region23: #{self_attention_forward.1} parent=11 // pred_region
          _
        $region24: #{self_attention_forward.1} parent=11 // pred_fallthru
          _
      $region12: #{self_attention_forward.1} parent=5 // pred_fallthru
        _
      %p152 = scmp.lt.s32.totalorder %s13, 2
      // Predicated region
      $region25: #{self_attention_forward.1} parent=5 // pred_check
        %p153 = pneg %p152
      $region26: #{self_attention_forward.1} parent=5 // pred_check_branch
        %155 = sbr.rel (%p153) target = $region28
      $region27: #{self_attention_forward.1} parent=5 // pred_region
        // Predicated region
        $region29: #{self_attention_forward.1} parent=27 // pred_check
          %p156 = pneg %p33
        $region30: #{self_attention_forward.1} parent=27 // pred_check_branch
          %158 = sbr.rel (%p156) target = $region32
        $region31: #{self_attention_forward.1} parent=27 // pred_region
          %p159 = scmp.lt.s32.totalorder %s13, 1
          %s160 = scalar_select %p159, %s13, 1
          %s161 = smul.addr %s160, 8
          %s162 = scalar_lea.vmem %s0, %s161
        $region32: #{self_attention_forward.1} parent=27 // pred_fallthru
          _
      $region28: #{self_attention_forward.1} parent=5 // pred_fallthru
        _
      %p163 = scmp.le.s32.totalorder 1, %s13
      %p164 = scmp.lt.s32.totalorder %s13, 3
      %p165 = pnand %p163, %p164
      %p166 = pneg %p165
      // Predicated region
      $region33: #{self_attention_forward.1} parent=5 // pred_check
        _
      $region34: #{self_attention_forward.1} parent=5 // pred_check_branch
        %168 = sbr.rel (%p165) target = $region36
      $region35: #{self_attention_forward.1} parent=5 // pred_region
        %s169 = ssub.s32 %s13, 1
        %p170 = scmp.lt.s32.totalorder %s18, 1
        %s171 = scalar_select %p170, %s18, 1
        %s172 = smul.addr %s171, 8
        %s173 = scalar_lea.vmem %s0, %s172
        %p174 = pneg %p39
        %p175 = pneg %p36
        %p176 = pneg %p60
        %p177 = pneg %p57
        %p178 = pneg %p81
        %p179 = pneg %p78
        %p180 = pneg %p102
        %p181 = pneg %p99
        %p182 = pneg %p128
        %p183 = pneg %p125
        %s184 = sand.u32 %s115, 1
        %s185 = scalar_lea.sflag [#allocation3], %s184
        %s186 = sand.u32 %s115, 1
        %s187 = smul.addr %s186, 8
        %s188 = scalar_lea.vmem [#allocation2], %s187
        %p189 = scmp.lt.s32.totalorder %s18, 1
        %s190 = scalar_select %p189, %s18, 1
        %s191 = smul.addr %s190, 8
        %s192 = scalar_lea.vmem %s0, %s191
        %v193 = vld [vmem:[%s192] sm:$0xff]
        %v194 = vld [vmem:[%s1] sm:$0xf]
        %v195 = vld [vmem:[%s1 + $0x4] sm:$0xf]
        %v196 = vld [vmem:[%s1 + $0x8] sm:$0xf]
        %v197 = vld [vmem:[%s1 + $0xc] sm:$0xf]
        %v198 = vld [vmem:[%s1 + $0x10] sm:$0xf]
        %v199 = vld [vmem:[%s1 + $0x14] sm:$0xf]
        %v200 = vld [vmem:[%s1 + $0x18] sm:$0xf]
        %v201 = vld [vmem:[%s1 + $0x1c] sm:$0xf]
        %vm202 = vcmask 261120
        %v204 = vsel %vm202, %v193, 0
        %v207 = vsel %vm202, %v194, 0
        %209 = vmatpush.xpose.msra.mxu0 0.0
        %210 = vmatpush.xpose.msra.mxu0 0.0
        %211 = vmatpush.xpose.msra.mxu0 0.0
        %212 = vmatpush.xpose.msra.mxu0 0.0
        %213 = vmatpush.xpose.msra.mxu0 0.0
        %214 = vmatpush.xpose.msra.mxu0 0.0
        %215 = vmatpush.xpose.msra.mxu0 0.0
        %216 = vmatpush.xpose.msra.mxu0 0.0
        %217 = vmatpush.xpose.msra.mxu0 0.0
        %218 = vmatpush.xpose.msra.mxu0 0.0
        %219 = vmatpush.xpose.msra.mxu0 0.0
        %220 = vmatpush.xpose.msra.mxu0 0.0
        %221 = vmatpush.xpose.msra.mxu0 0.0
        %222 = vmatpush.xpose.msra.mxu0 0.0
        %223 = vmatpush.xpose.msra.mxu0 0.0
        %224 = vmatpush.xpose.msra.mxu0 %v207
        %225 = vmatmul.f32.gmra.mxu0 %v204
        %v226 = vpop.f32.mrf.mxu0
        %v227 = vadd.f32 0.0, %v226
        %228 = vdwg.mxu0
        %v230 = vsel %vm202, %v195, 0
        %232 = vmatpush.xpose.msra.mxu0 0.0
        %233 = vmatpush.xpose.msra.mxu0 0.0
        %234 = vmatpush.xpose.msra.mxu0 0.0
        %235 = vmatpush.xpose.msra.mxu0 0.0
        %236 = vmatpush.xpose.msra.mxu0 0.0
        %237 = vmatpush.xpose.msra.mxu0 0.0
        %238 = vmatpush.xpose.msra.mxu0 0.0
        %239 = vmatpush.xpose.msra.mxu0 0.0
        %240 = vmatpush.xpose.msra.mxu0 0.0
        %241 = vmatpush.xpose.msra.mxu0 0.0
        %242 = vmatpush.xpose.msra.mxu0 0.0
        %243 = vmatpush.xpose.msra.mxu0 0.0
        %244 = vmatpush.xpose.msra.mxu0 0.0
        %245 = vmatpush.xpose.msra.mxu0 0.0
        %246 = vmatpush.xpose.msra.mxu0 0.0
        %247 = vmatpush.xpose.msra.mxu0 %v230
        %248 = vmatmul.f32.gmra.mxu0 %v204
        %v249 = vpop.f32.mrf.mxu0
        %v250 = vadd.f32 0.0, %v249
        %251 = vdwg.mxu0
        %v253 = vsel %vm202, %v196, 0
        %255 = vmatpush.xpose.msra.mxu0 0.0
        %256 = vmatpush.xpose.msra.mxu0 0.0
        %257 = vmatpush.xpose.msra.mxu0 0.0
        %258 = vmatpush.xpose.msra.mxu0 0.0
        %259 = vmatpush.xpose.msra.mxu0 0.0
        %260 = vmatpush.xpose.msra.mxu0 0.0
        %261 = vmatpush.xpose.msra.mxu0 0.0
        %262 = vmatpush.xpose.msra.mxu0 0.0
        %263 = vmatpush.xpose.msra.mxu0 0.0
        %264 = vmatpush.xpose.msra.mxu0 0.0
        %265 = vmatpush.xpose.msra.mxu0 0.0
        %266 = vmatpush.xpose.msra.mxu0 0.0
        %267 = vmatpush.xpose.msra.mxu0 0.0
        %268 = vmatpush.xpose.msra.mxu0 0.0
        %269 = vmatpush.xpose.msra.mxu0 0.0
        %270 = vmatpush.xpose.msra.mxu0 %v253
        %271 = vmatmul.f32.gmra.mxu0 %v204
        %v272 = vpop.f32.mrf.mxu0
        %v273 = vadd.f32 0.0, %v272
        %274 = vdwg.mxu0
        %v276 = vsel %vm202, %v197, 0
        %278 = vmatpush.xpose.msra.mxu0 0.0
        %279 = vmatpush.xpose.msra.mxu0 0.0
        %280 = vmatpush.xpose.msra.mxu0 0.0
        %281 = vmatpush.xpose.msra.mxu0 0.0
        %282 = vmatpush.xpose.msra.mxu0 0.0
        %283 = vmatpush.xpose.msra.mxu0 0.0
        %284 = vmatpush.xpose.msra.mxu0 0.0
        %285 = vmatpush.xpose.msra.mxu0 0.0
        %286 = vmatpush.xpose.msra.mxu0 0.0
        %287 = vmatpush.xpose.msra.mxu0 0.0
        %288 = vmatpush.xpose.msra.mxu0 0.0
        %289 = vmatpush.xpose.msra.mxu0 0.0
        %290 = vmatpush.xpose.msra.mxu0 0.0
        %291 = vmatpush.xpose.msra.mxu0 0.0
        %292 = vmatpush.xpose.msra.mxu0 0.0
        %293 = vmatpush.xpose.msra.mxu0 %v276
        %294 = vmatmul.f32.gmra.mxu0 %v204
        %v295 = vpop.f32.mrf.mxu0
        %v296 = vadd.f32 0.0, %v295
        %297 = vdwg.mxu0
        %v299 = vsel %vm202, %v198, 0
        %301 = vmatpush.xpose.msra.mxu0 0.0
        %302 = vmatpush.xpose.msra.mxu0 0.0
        %303 = vmatpush.xpose.msra.mxu0 0.0
        %304 = vmatpush.xpose.msra.mxu0 0.0
        %305 = vmatpush.xpose.msra.mxu0 0.0
        %306 = vmatpush.xpose.msra.mxu0 0.0
        %307 = vmatpush.xpose.msra.mxu0 0.0
        %308 = vmatpush.xpose.msra.mxu0 0.0
        %309 = vmatpush.xpose.msra.mxu0 0.0
        %310 = vmatpush.xpose.msra.mxu0 0.0
        %311 = vmatpush.xpose.msra.mxu0 0.0
        %312 = vmatpush.xpose.msra.mxu0 0.0
        %313 = vmatpush.xpose.msra.mxu0 0.0
        %314 = vmatpush.xpose.msra.mxu0 0.0
        %315 = vmatpush.xpose.msra.mxu0 0.0
        %316 = vmatpush.xpose.msra.mxu0 %v299
        %317 = vmatmul.f32.gmra.mxu0 %v204
        %v318 = vpop.f32.mrf.mxu0
        %v319 = vadd.f32 0.0, %v318
        %320 = vdwg.mxu0
        %v322 = vsel %vm202, %v199, 0
        %324 = vmatpush.xpose.msra.mxu0 0.0
        %325 = vmatpush.xpose.msra.mxu0 0.0
        %326 = vmatpush.xpose.msra.mxu0 0.0
        %327 = vmatpush.xpose.msra.mxu0 0.0
        %328 = vmatpush.xpose.msra.mxu0 0.0
        %329 = vmatpush.xpose.msra.mxu0 0.0
        %330 = vmatpush.xpose.msra.mxu0 0.0
        %331 = vmatpush.xpose.msra.mxu0 0.0
        %332 = vmatpush.xpose.msra.mxu0 0.0
        %333 = vmatpush.xpose.msra.mxu0 0.0
        %334 = vmatpush.xpose.msra.mxu0 0.0
        %335 = vmatpush.xpose.msra.mxu0 0.0
        %336 = vmatpush.xpose.msra.mxu0 0.0
        %337 = vmatpush.xpose.msra.mxu0 0.0
        %338 = vmatpush.xpose.msra.mxu0 0.0
        %339 = vmatpush.xpose.msra.mxu0 %v322
        %340 = vmatmul.f32.gmra.mxu0 %v204
        %v341 = vpop.f32.mrf.mxu0
        %v342 = vadd.f32 0.0, %v341
        %343 = vdwg.mxu0
        %v345 = vsel %vm202, %v200, 0
        %347 = vmatpush.xpose.msra.mxu0 0.0
        %348 = vmatpush.xpose.msra.mxu0 0.0
        %349 = vmatpush.xpose.msra.mxu0 0.0
        %350 = vmatpush.xpose.msra.mxu0 0.0
        %351 = vmatpush.xpose.msra.mxu0 0.0
        %352 = vmatpush.xpose.msra.mxu0 0.0
        %353 = vmatpush.xpose.msra.mxu0 0.0
        %354 = vmatpush.xpose.msra.mxu0 0.0
        %355 = vmatpush.xpose.msra.mxu0 0.0
        %356 = vmatpush.xpose.msra.mxu0 0.0
        %357 = vmatpush.xpose.msra.mxu0 0.0
        %358 = vmatpush.xpose.msra.mxu0 0.0
        %359 = vmatpush.xpose.msra.mxu0 0.0
        %360 = vmatpush.xpose.msra.mxu0 0.0
        %361 = vmatpush.xpose.msra.mxu0 0.0
        %362 = vmatpush.xpose.msra.mxu0 %v345
        %363 = vmatmul.f32.gmra.mxu0 %v204
        %v364 = vpop.f32.mrf.mxu0
        %v365 = vadd.f32 0.0, %v364
        %366 = vdwg.mxu0
        %v368 = vsel %vm202, %v201, 0
        %370 = vmatpush.xpose.msra.mxu0 0.0
        %371 = vmatpush.xpose.msra.mxu0 0.0
        %372 = vmatpush.xpose.msra.mxu0 0.0
        %373 = vmatpush.xpose.msra.mxu0 0.0
        %374 = vmatpush.xpose.msra.mxu0 0.0
        %375 = vmatpush.xpose.msra.mxu0 0.0
        %376 = vmatpush.xpose.msra.mxu0 0.0
        %377 = vmatpush.xpose.msra.mxu0 0.0
        %378 = vmatpush.xpose.msra.mxu0 0.0
        %379 = vmatpush.xpose.msra.mxu0 0.0
        %380 = vmatpush.xpose.msra.mxu0 0.0
        %381 = vmatpush.xpose.msra.mxu0 0.0
        %382 = vmatpush.xpose.msra.mxu0 0.0
        %383 = vmatpush.xpose.msra.mxu0 0.0
        %384 = vmatpush.xpose.msra.mxu0 0.0
        %385 = vmatpush.xpose.msra.mxu0 %v368
        %386 = vmatmul.f32.gmra.mxu0 %v204
        %v387 = vpop.f32.mrf.mxu0
        %v388 = vadd.f32 0.0, %v387
        %389 = vdwg.mxu0
        %v390 = vld [vmem:[%s2] sm:$0xf]
        %v391 = vld [vmem:[%s2 + $0x4] sm:$0xf]
        %v392 = vld [vmem:[%s2 + $0x8] sm:$0xf]
        %v393 = vld [vmem:[%s2 + $0xc] sm:$0xf]
        %v394 = vld [vmem:[%s2 + $0x10] sm:$0xf]
        %v395 = vld [vmem:[%s2 + $0x14] sm:$0xf]
        %v396 = vld [vmem:[%s2 + $0x18] sm:$0xf]
        %v397 = vld [vmem:[%s2 + $0x1c] sm:$0xf]
        %v399 = vsel %vm202, %v390, 0
        %401 = vmatpush.xpose.msra.mxu0 0.0
        %402 = vmatpush.xpose.msra.mxu0 0.0
        %403 = vmatpush.xpose.msra.mxu0 0.0
        %404 = vmatpush.xpose.msra.mxu0 0.0
        %405 = vmatpush.xpose.msra.mxu0 0.0
        %406 = vmatpush.xpose.msra.mxu0 0.0
        %407 = vmatpush.xpose.msra.mxu0 0.0
        %408 = vmatpush.xpose.msra.mxu0 0.0
        %409 = vmatpush.xpose.msra.mxu0 0.0
        %410 = vmatpush.xpose.msra.mxu0 0.0
        %411 = vmatpush.xpose.msra.mxu0 0.0
        %412 = vmatpush.xpose.msra.mxu0 0.0
        %413 = vmatpush.xpose.msra.mxu0 0.0
        %414 = vmatpush.xpose.msra.mxu0 0.0
        %415 = vmatpush.xpose.msra.mxu0 0.0
        %416 = vmatpush.xpose.msra.mxu0 %v399
        %417 = vmatmul.f32.gmra.mxu0 %v204
        %v418 = vpop.f32.mrf.mxu0
        %v419 = vadd.f32 0.0, %v418
        %420 = vdwg.mxu0
        %v422 = vsel %vm202, %v391, 0
        %424 = vmatpush.xpose.msra.mxu0 0.0
        %425 = vmatpush.xpose.msra.mxu0 0.0
        %426 = vmatpush.xpose.msra.mxu0 0.0
        %427 = vmatpush.xpose.msra.mxu0 0.0
        %428 = vmatpush.xpose.msra.mxu0 0.0
        %429 = vmatpush.xpose.msra.mxu0 0.0
        %430 = vmatpush.xpose.msra.mxu0 0.0
        %431 = vmatpush.xpose.msra.mxu0 0.0
        %432 = vmatpush.xpose.msra.mxu0 0.0
        %433 = vmatpush.xpose.msra.mxu0 0.0
        %434 = vmatpush.xpose.msra.mxu0 0.0
        %435 = vmatpush.xpose.msra.mxu0 0.0
        %436 = vmatpush.xpose.msra.mxu0 0.0
        %437 = vmatpush.xpose.msra.mxu0 0.0
        %438 = vmatpush.xpose.msra.mxu0 0.0
        %439 = vmatpush.xpose.msra.mxu0 %v422
        %440 = vmatmul.f32.gmra.mxu0 %v204
        %v441 = vpop.f32.mrf.mxu0
        %v442 = vadd.f32 0.0, %v441
        %443 = vdwg.mxu0
        %v445 = vsel %vm202, %v392, 0
        %447 = vmatpush.xpose.msra.mxu0 0.0
        %448 = vmatpush.xpose.msra.mxu0 0.0
        %449 = vmatpush.xpose.msra.mxu0 0.0
        %450 = vmatpush.xpose.msra.mxu0 0.0
        %451 = vmatpush.xpose.msra.mxu0 0.0
        %452 = vmatpush.xpose.msra.mxu0 0.0
        %453 = vmatpush.xpose.msra.mxu0 0.0
        %454 = vmatpush.xpose.msra.mxu0 0.0
        %455 = vmatpush.xpose.msra.mxu0 0.0
        %456 = vmatpush.xpose.msra.mxu0 0.0
        %457 = vmatpush.xpose.msra.mxu0 0.0
        %458 = vmatpush.xpose.msra.mxu0 0.0
        %459 = vmatpush.xpose.msra.mxu0 0.0
        %460 = vmatpush.xpose.msra.mxu0 0.0
        %461 = vmatpush.xpose.msra.mxu0 0.0
        %462 = vmatpush.xpose.msra.mxu0 %v445
        %463 = vmatmul.f32.gmra.mxu0 %v204
        %v464 = vpop.f32.mrf.mxu0
        %v465 = vadd.f32 0.0, %v464
        %466 = vdwg.mxu0
        %v468 = vsel %vm202, %v393, 0
        %470 = vmatpush.xpose.msra.mxu0 0.0
        %471 = vmatpush.xpose.msra.mxu0 0.0
        %472 = vmatpush.xpose.msra.mxu0 0.0
        %473 = vmatpush.xpose.msra.mxu0 0.0
        %474 = vmatpush.xpose.msra.mxu0 0.0
        %475 = vmatpush.xpose.msra.mxu0 0.0
        %476 = vmatpush.xpose.msra.mxu0 0.0
        %477 = vmatpush.xpose.msra.mxu0 0.0
        %478 = vmatpush.xpose.msra.mxu0 0.0
        %479 = vmatpush.xpose.msra.mxu0 0.0
        %480 = vmatpush.xpose.msra.mxu0 0.0
        %481 = vmatpush.xpose.msra.mxu0 0.0
        %482 = vmatpush.xpose.msra.mxu0 0.0
        %483 = vmatpush.xpose.msra.mxu0 0.0
        %484 = vmatpush.xpose.msra.mxu0 0.0
        %485 = vmatpush.xpose.msra.mxu0 %v468
        %486 = vmatmul.f32.gmra.mxu0 %v204
        %v487 = vpop.f32.mrf.mxu0
        %v488 = vadd.f32 0.0, %v487
        %489 = vdwg.mxu0
        %v491 = vsel %vm202, %v394, 0
        %493 = vmatpush.xpose.msra.mxu0 0.0
        %494 = vmatpush.xpose.msra.mxu0 0.0
        %495 = vmatpush.xpose.msra.mxu0 0.0
        %496 = vmatpush.xpose.msra.mxu0 0.0
        %497 = vmatpush.xpose.msra.mxu0 0.0
        %498 = vmatpush.xpose.msra.mxu0 0.0
        %499 = vmatpush.xpose.msra.mxu0 0.0
        %500 = vmatpush.xpose.msra.mxu0 0.0
        %501 = vmatpush.xpose.msra.mxu0 0.0
        %502 = vmatpush.xpose.msra.mxu0 0.0
        %503 = vmatpush.xpose.msra.mxu0 0.0
        %504 = vmatpush.xpose.msra.mxu0 0.0
        %505 = vmatpush.xpose.msra.mxu0 0.0
        %506 = vmatpush.xpose.msra.mxu0 0.0
        %507 = vmatpush.xpose.msra.mxu0 0.0
        %508 = vmatpush.xpose.msra.mxu0 %v491
        %509 = vmatmul.f32.gmra.mxu0 %v204
        %v510 = vpop.f32.mrf.mxu0
        %v511 = vadd.f32 0.0, %v510
        %512 = vdwg.mxu0
        %v514 = vsel %vm202, %v395, 0
        %516 = vmatpush.xpose.msra.mxu0 0.0
        %517 = vmatpush.xpose.msra.mxu0 0.0
        %518 = vmatpush.xpose.msra.mxu0 0.0
        %519 = vmatpush.xpose.msra.mxu0 0.0
        %520 = vmatpush.xpose.msra.mxu0 0.0
        %521 = vmatpush.xpose.msra.mxu0 0.0
        %522 = vmatpush.xpose.msra.mxu0 0.0
        %523 = vmatpush.xpose.msra.mxu0 0.0
        %524 = vmatpush.xpose.msra.mxu0 0.0
        %525 = vmatpush.xpose.msra.mxu0 0.0
        %526 = vmatpush.xpose.msra.mxu0 0.0
        %527 = vmatpush.xpose.msra.mxu0 0.0
        %528 = vmatpush.xpose.msra.mxu0 0.0
        %529 = vmatpush.xpose.msra.mxu0 0.0
        %530 = vmatpush.xpose.msra.mxu0 0.0
        %531 = vmatpush.xpose.msra.mxu0 %v514
        %532 = vmatmul.f32.gmra.mxu0 %v204
        %v533 = vpop.f32.mrf.mxu0
        %v534 = vadd.f32 0.0, %v533
        %535 = vdwg.mxu0
        %v537 = vsel %vm202, %v396, 0
        %539 = vmatpush.xpose.msra.mxu0 0.0
        %540 = vmatpush.xpose.msra.mxu0 0.0
        %541 = vmatpush.xpose.msra.mxu0 0.0
        %542 = vmatpush.xpose.msra.mxu0 0.0
        %543 = vmatpush.xpose.msra.mxu0 0.0
        %544 = vmatpush.xpose.msra.mxu0 0.0
        %545 = vmatpush.xpose.msra.mxu0 0.0
        %546 = vmatpush.xpose.msra.mxu0 0.0
        %547 = vmatpush.xpose.msra.mxu0 0.0
        %548 = vmatpush.xpose.msra.mxu0 0.0
        %549 = vmatpush.xpose.msra.mxu0 0.0
        %550 = vmatpush.xpose.msra.mxu0 0.0
        %551 = vmatpush.xpose.msra.mxu0 0.0
        %552 = vmatpush.xpose.msra.mxu0 0.0
        %553 = vmatpush.xpose.msra.mxu0 0.0
        %554 = vmatpush.xpose.msra.mxu0 %v537
        %555 = vmatmul.f32.gmra.mxu0 %v204
        %v556 = vpop.f32.mrf.mxu0
        %v557 = vadd.f32 0.0, %v556
        %558 = vdwg.mxu0
        %v560 = vsel %vm202, %v397, 0
        %562 = vmatpush.xpose.msra.mxu0 0.0
        %563 = vmatpush.xpose.msra.mxu0 0.0
        %564 = vmatpush.xpose.msra.mxu0 0.0
        %565 = vmatpush.xpose.msra.mxu0 0.0
        %566 = vmatpush.xpose.msra.mxu0 0.0
        %567 = vmatpush.xpose.msra.mxu0 0.0
        %568 = vmatpush.xpose.msra.mxu0 0.0
        %569 = vmatpush.xpose.msra.mxu0 0.0
        %570 = vmatpush.xpose.msra.mxu0 0.0
        %571 = vmatpush.xpose.msra.mxu0 0.0
        %572 = vmatpush.xpose.msra.mxu0 0.0
        %573 = vmatpush.xpose.msra.mxu0 0.0
        %574 = vmatpush.xpose.msra.mxu0 0.0
        %575 = vmatpush.xpose.msra.mxu0 0.0
        %576 = vmatpush.xpose.msra.mxu0 0.0
        %577 = vmatpush.xpose.msra.mxu0 %v560
        %578 = vmatmul.f32.gmra.mxu0 %v204
        %v579 = vpop.f32.mrf.mxu0
        %v580 = vadd.f32 0.0, %v579
        %581 = vdwg.mxu0
        %vm582 = vcmask 31744
        %v584 = vsel %vm582, %v227, 0
        %586 = vmatpush.xpose.msra.mxu0 0.0
        %587 = vmatpush.xpose.msra.mxu0 0.0
        %588 = vmatpush.xpose.msra.mxu0 0.0
        %589 = vmatpush.xpose.msra.mxu0 0.0
        %590 = vmatpush.xpose.msra.mxu0 0.0
        %591 = vmatpush.xpose.msra.mxu0 0.0
        %592 = vmatpush.xpose.msra.mxu0 0.0
        %593 = vmatpush.xpose.msra.mxu0 0.0
        %594 = vmatpush.xpose.msra.mxu0 0.0
        %595 = vmatpush.xpose.msra.mxu0 0.0
        %596 = vmatpush.xpose.msra.mxu0 0.0
        %597 = vmatpush.xpose.msra.mxu0 0.0
        %598 = vmatpush.xpose.msra.mxu0 0.0
        %599 = vmatpush.xpose.msra.mxu0 0.0
        %600 = vmatpush.xpose.msra.mxu0 0.0
        %601 = vmatpush.xpose.msra.mxu0 %v584
        %602 = vmatmul.f32.gmra.mxu0 %v584
        %v603 = vpop.f32.mrf.mxu0
        %v604 = vadd.f32 0.0, %v603
        %605 = vdwg.mxu0
        %v607 = vsel %vm582, %v250, 0
        %609 = vmatpush.xpose.msra.mxu0 0.0
        %610 = vmatpush.xpose.msra.mxu0 0.0
        %611 = vmatpush.xpose.msra.mxu0 0.0
        %612 = vmatpush.xpose.msra.mxu0 0.0
        %613 = vmatpush.xpose.msra.mxu0 0.0
        %614 = vmatpush.xpose.msra.mxu0 0.0
        %615 = vmatpush.xpose.msra.mxu0 0.0
        %616 = vmatpush.xpose.msra.mxu0 0.0
        %617 = vmatpush.xpose.msra.mxu0 0.0
        %618 = vmatpush.xpose.msra.mxu0 0.0
        %619 = vmatpush.xpose.msra.mxu0 0.0
        %620 = vmatpush.xpose.msra.mxu0 0.0
        %621 = vmatpush.xpose.msra.mxu0 0.0
        %622 = vmatpush.xpose.msra.mxu0 0.0
        %623 = vmatpush.xpose.msra.mxu0 0.0
        %624 = vmatpush.xpose.msra.mxu0 %v607
        %625 = vmatmul.f32.gmra.mxu0 %v607
        %v626 = vpop.f32.mrf.mxu0
        %v627 = vadd.f32 0.0, %v626
        %628 = vdwg.mxu0
        %v630 = vsel %vm582, %v273, 0
        %632 = vmatpush.xpose.msra.mxu0 0.0
        %633 = vmatpush.xpose.msra.mxu0 0.0
        %634 = vmatpush.xpose.msra.mxu0 0.0
        %635 = vmatpush.xpose.msra.mxu0 0.0
        %636 = vmatpush.xpose.msra.mxu0 0.0
        %637 = vmatpush.xpose.msra.mxu0 0.0
        %638 = vmatpush.xpose.msra.mxu0 0.0
        %639 = vmatpush.xpose.msra.mxu0 0.0
        %640 = vmatpush.xpose.msra.mxu0 0.0
        %641 = vmatpush.xpose.msra.mxu0 0.0
        %642 = vmatpush.xpose.msra.mxu0 0.0
        %643 = vmatpush.xpose.msra.mxu0 0.0
        %644 = vmatpush.xpose.msra.mxu0 0.0
        %645 = vmatpush.xpose.msra.mxu0 0.0
        %646 = vmatpush.xpose.msra.mxu0 0.0
        %647 = vmatpush.xpose.msra.mxu0 %v630
        %648 = vmatmul.f32.gmra.mxu0 %v630
        %v649 = vpop.f32.mrf.mxu0
        %v650 = vadd.f32 0.0, %v649
        %651 = vdwg.mxu0
        %v653 = vsel %vm582, %v296, 0
        %655 = vmatpush.xpose.msra.mxu0 0.0
        %656 = vmatpush.xpose.msra.mxu0 0.0
        %657 = vmatpush.xpose.msra.mxu0 0.0
        %658 = vmatpush.xpose.msra.mxu0 0.0
        %659 = vmatpush.xpose.msra.mxu0 0.0
        %660 = vmatpush.xpose.msra.mxu0 0.0
        %661 = vmatpush.xpose.msra.mxu0 0.0
        %662 = vmatpush.xpose.msra.mxu0 0.0
        %663 = vmatpush.xpose.msra.mxu0 0.0
        %664 = vmatpush.xpose.msra.mxu0 0.0
        %665 = vmatpush.xpose.msra.mxu0 0.0
        %666 = vmatpush.xpose.msra.mxu0 0.0
        %667 = vmatpush.xpose.msra.mxu0 0.0
        %668 = vmatpush.xpose.msra.mxu0 0.0
        %669 = vmatpush.xpose.msra.mxu0 0.0
        %670 = vmatpush.xpose.msra.mxu0 %v653
        %671 = vmatmul.f32.gmra.mxu0 %v653
        %v672 = vpop.f32.mrf.mxu0
        %v673 = vadd.f32 0.0, %v672
        %674 = vdwg.mxu0
        %v676 = vsel %vm582, %v319, 0
        %678 = vmatpush.xpose.msra.mxu0 0.0
        %679 = vmatpush.xpose.msra.mxu0 0.0
        %680 = vmatpush.xpose.msra.mxu0 0.0
        %681 = vmatpush.xpose.msra.mxu0 0.0
        %682 = vmatpush.xpose.msra.mxu0 0.0
        %683 = vmatpush.xpose.msra.mxu0 0.0
        %684 = vmatpush.xpose.msra.mxu0 0.0
        %685 = vmatpush.xpose.msra.mxu0 0.0
        %686 = vmatpush.xpose.msra.mxu0 0.0
        %687 = vmatpush.xpose.msra.mxu0 0.0
        %688 = vmatpush.xpose.msra.mxu0 0.0
        %689 = vmatpush.xpose.msra.mxu0 0.0
        %690 = vmatpush.xpose.msra.mxu0 0.0
        %691 = vmatpush.xpose.msra.mxu0 0.0
        %692 = vmatpush.xpose.msra.mxu0 0.0
        %693 = vmatpush.xpose.msra.mxu0 %v676
        %694 = vmatmul.f32.gmra.mxu0 %v676
        %v695 = vpop.f32.mrf.mxu0
        %v696 = vadd.f32 0.0, %v695
        %697 = vdwg.mxu0
        %v699 = vsel %vm582, %v342, 0
        %701 = vmatpush.xpose.msra.mxu0 0.0
        %702 = vmatpush.xpose.msra.mxu0 0.0
        %703 = vmatpush.xpose.msra.mxu0 0.0
        %704 = vmatpush.xpose.msra.mxu0 0.0
        %705 = vmatpush.xpose.msra.mxu0 0.0
        %706 = vmatpush.xpose.msra.mxu0 0.0
        %707 = vmatpush.xpose.msra.mxu0 0.0
        %708 = vmatpush.xpose.msra.mxu0 0.0
        %709 = vmatpush.xpose.msra.mxu0 0.0
        %710 = vmatpush.xpose.msra.mxu0 0.0
        %711 = vmatpush.xpose.msra.mxu0 0.0
        %712 = vmatpush.xpose.msra.mxu0 0.0
        %713 = vmatpush.xpose.msra.mxu0 0.0
        %714 = vmatpush.xpose.msra.mxu0 0.0
        %715 = vmatpush.xpose.msra.mxu0 0.0
        %716 = vmatpush.xpose.msra.mxu0 %v699
        %717 = vmatmul.f32.gmra.mxu0 %v699
        %v718 = vpop.f32.mrf.mxu0
        %v719 = vadd.f32 0.0, %v718
        %720 = vdwg.mxu0
        %v722 = vsel %vm582, %v365, 0
        %724 = vmatpush.xpose.msra.mxu0 0.0
        %725 = vmatpush.xpose.msra.mxu0 0.0
        %726 = vmatpush.xpose.msra.mxu0 0.0
        %727 = vmatpush.xpose.msra.mxu0 0.0
        %728 = vmatpush.xpose.msra.mxu0 0.0
        %729 = vmatpush.xpose.msra.mxu0 0.0
        %730 = vmatpush.xpose.msra.mxu0 0.0
        %731 = vmatpush.xpose.msra.mxu0 0.0
        %732 = vmatpush.xpose.msra.mxu0 0.0
        %733 = vmatpush.xpose.msra.mxu0 0.0
        %734 = vmatpush.xpose.msra.mxu0 0.0
        %735 = vmatpush.xpose.msra.mxu0 0.0
        %736 = vmatpush.xpose.msra.mxu0 0.0
        %737 = vmatpush.xpose.msra.mxu0 0.0
        %738 = vmatpush.xpose.msra.mxu0 0.0
        %739 = vmatpush.xpose.msra.mxu0 %v722
        %740 = vmatmul.f32.gmra.mxu0 %v722
        %v741 = vpop.f32.mrf.mxu0
        %v742 = vadd.f32 0.0, %v741
        %743 = vdwg.mxu0
        %v745 = vsel %vm582, %v388, 0
        %747 = vmatpush.xpose.msra.mxu0 0.0
        %748 = vmatpush.xpose.msra.mxu0 0.0
        %749 = vmatpush.xpose.msra.mxu0 0.0
        %750 = vmatpush.xpose.msra.mxu0 0.0
        %751 = vmatpush.xpose.msra.mxu0 0.0
        %752 = vmatpush.xpose.msra.mxu0 0.0
        %753 = vmatpush.xpose.msra.mxu0 0.0
        %754 = vmatpush.xpose.msra.mxu0 0.0
        %755 = vmatpush.xpose.msra.mxu0 0.0
        %756 = vmatpush.xpose.msra.mxu0 0.0
        %757 = vmatpush.xpose.msra.mxu0 0.0
        %758 = vmatpush.xpose.msra.mxu0 0.0
        %759 = vmatpush.xpose.msra.mxu0 0.0
        %760 = vmatpush.xpose.msra.mxu0 0.0
        %761 = vmatpush.xpose.msra.mxu0 0.0
        %762 = vmatpush.xpose.msra.mxu0 %v745
        %763 = vmatmul.f32.gmra.mxu0 %v745
        %v764 = vpop.f32.mrf.mxu0
        %v765 = vadd.f32 0.0, %v764
        %766 = vdwg.mxu0
        %v767 = vmul.f32 %v604, 0.5
        %v768 = vmul.f32 %v627, 0.5
        %v769 = vmul.f32 %v650, 0.5
        %v770 = vmul.f32 %v673, 0.5
        %v771 = vmul.f32 %v696, 0.5
        %v772 = vmul.f32 %v719, 0.5
        %v773 = vmul.f32 %v742, 0.5
        %v774 = vmul.f32 %v765, 0.5
        %vm775 = vcmask 64512
        %v776 = vsel %vm775, %v767, -inf
        %777 = vmax.xlane.f32.xlu0 %v776
        %v778 = vpop.xlane.xlu0 %777
        %v779 = vsel %vm775, %v768, -inf
        %780 = vmax.xlane.f32.xlu0 %v779
        %v781 = vpop.xlane.xlu0 %780
        %v782 = vsel %vm775, %v769, -inf
        %783 = vmax.xlane.f32.xlu0 %v782
        %v784 = vpop.xlane.xlu0 %783
        %v785 = vsel %vm775, %v770, -inf
        %786 = vmax.xlane.f32.xlu0 %v785
        %v787 = vpop.xlane.xlu0 %786
        %v788 = vsel %vm775, %v771, -inf
        %789 = vmax.xlane.f32.xlu0 %v788
        %v790 = vpop.xlane.xlu0 %789
        %v791 = vsel %vm775, %v772, -inf
        %792 = vmax.xlane.f32.xlu0 %v791
        %v793 = vpop.xlane.xlu0 %792
        %v794 = vsel %vm775, %v773, -inf
        %795 = vmax.xlane.f32.xlu0 %v794
        %v796 = vpop.xlane.xlu0 %795
        %v797 = vsel %vm775, %v774, -inf
        %798 = vmax.xlane.f32.xlu0 %v797
        %v799 = vpop.xlane.xlu0 %798
        %v800 = vsub.f32 %v767, %v778
        %v801 = vsub.f32 %v768, %v781
        %v802 = vsub.f32 %v769, %v784
        %v803 = vsub.f32 %v770, %v787
        %v804 = vsub.f32 %v771, %v790
        %v805 = vsub.f32 %v772, %v793
        %v806 = vsub.f32 %v773, %v796
        %v807 = vsub.f32 %v774, %v799
        %v808 = vmul.f32 %v800, 1.442695
        %v809 = vpow.pop %v808
        %v810 = vmul.f32 %v801, 1.442695
        %v811 = vpow.pop %v810
        %v812 = vmul.f32 %v802, 1.442695
        %v813 = vpow.pop %v812
        %v814 = vmul.f32 %v803, 1.442695
        %v815 = vpow.pop %v814
        %v816 = vmul.f32 %v804, 1.442695
        %v817 = vpow.pop %v816
        %v818 = vmul.f32 %v805, 1.442695
        %v819 = vpow.pop %v818
        %v820 = vmul.f32 %v806, 1.442695
        %v821 = vpow.pop %v820
        %v822 = vmul.f32 %v807, 1.442695
        %v823 = vpow.pop %v822
        %v824 = vsel %vm775, %v809, 0.0
        %825 = vadd.xlane.f32.xlu0 %v824
        %v826 = vpop.xlane.xlu0 %825
        %v827 = vsel %vm775, %v811, 0.0
        %828 = vadd.xlane.f32.xlu0 %v827
        %v829 = vpop.xlane.xlu0 %828
        %v830 = vsel %vm775, %v813, 0.0
        %831 = vadd.xlane.f32.xlu0 %v830
        %v832 = vpop.xlane.xlu0 %831
        %v833 = vsel %vm775, %v815, 0.0
        %834 = vadd.xlane.f32.xlu0 %v833
        %v835 = vpop.xlane.xlu0 %834
        %v836 = vsel %vm775, %v817, 0.0
        %837 = vadd.xlane.f32.xlu0 %v836
        %v838 = vpop.xlane.xlu0 %837
        %v839 = vsel %vm775, %v819, 0.0
        %840 = vadd.xlane.f32.xlu0 %v839
        %v841 = vpop.xlane.xlu0 %840
        %v842 = vsel %vm775, %v821, 0.0
        %843 = vadd.xlane.f32.xlu0 %v842
        %v844 = vpop.xlane.xlu0 %843
        %v845 = vsel %vm775, %v823, 0.0
        %846 = vadd.xlane.f32.xlu0 %v845
        %v847 = vpop.xlane.xlu0 %846
        %v848 = vrcp.pop %v826
        %v849 = vmul.f32 %v826, %v848
        %v850 = vsub.f32 1.0, %v849
        %v851 = vmul.f32 %v848, %v850
        %v852 = vadd.f32 %v848, %v851
        %vm853 = vweird.f32 %v826
        %vm854 = vweird.f32 %v848
        %vm855 = vmor %vm853, %vm854
        %v856 = vsel %vm855, %v848, %v852
        %v857 = vand.u32 2147483647, %v826
        %vm858 = vcmp.eq.f32.partialorder %v857, 8.507059e+37
        %v859 = vand.u32 %v826, 2147483648
        %v860 = vor.u32 1.1754944e-38, %v859
        %v861 = vsel %vm858, %v860, %v856
        %v862 = vmul.f32 %v809, %v861
        %v863 = vrcp.pop %v829
        %v864 = vmul.f32 %v829, %v863
        %v865 = vsub.f32 1.0, %v864
        %v866 = vmul.f32 %v863, %v865
        %v867 = vadd.f32 %v863, %v866
        %vm868 = vweird.f32 %v829
        %vm869 = vweird.f32 %v863
        %vm870 = vmor %vm868, %vm869
        %v871 = vsel %vm870, %v863, %v867
        %v872 = vand.u32 2147483647, %v829
        %vm873 = vcmp.eq.f32.partialorder %v872, 8.507059e+37
        %v874 = vand.u32 %v829, 2147483648
        %v875 = vor.u32 1.1754944e-38, %v874
        %v876 = vsel %vm873, %v875, %v871
        %v877 = vmul.f32 %v811, %v876
        %v878 = vrcp.pop %v832
        %v879 = vmul.f32 %v832, %v878
        %v880 = vsub.f32 1.0, %v879
        %v881 = vmul.f32 %v878, %v880
        %v882 = vadd.f32 %v878, %v881
        %vm883 = vweird.f32 %v832
        %vm884 = vweird.f32 %v878
        %vm885 = vmor %vm883, %vm884
        %v886 = vsel %vm885, %v878, %v882
        %v887 = vand.u32 2147483647, %v832
        %vm888 = vcmp.eq.f32.partialorder %v887, 8.507059e+37
        %v889 = vand.u32 %v832, 2147483648
        %v890 = vor.u32 1.1754944e-38, %v889
        %v891 = vsel %vm888, %v890, %v886
        %v892 = vmul.f32 %v813, %v891
        %v893 = vrcp.pop %v835
        %v894 = vmul.f32 %v835, %v893
        %v895 = vsub.f32 1.0, %v894
        %v896 = vmul.f32 %v893, %v895
        %v897 = vadd.f32 %v893, %v896
        %vm898 = vweird.f32 %v835
        %vm899 = vweird.f32 %v893
        %vm900 = vmor %vm898, %vm899
        %v901 = vsel %vm900, %v893, %v897
        %v902 = vand.u32 2147483647, %v835
        %vm903 = vcmp.eq.f32.partialorder %v902, 8.507059e+37
        %v904 = vand.u32 %v835, 2147483648
        %v905 = vor.u32 1.1754944e-38, %v904
        %v906 = vsel %vm903, %v905, %v901
        %v907 = vmul.f32 %v815, %v906
        %v908 = vrcp.pop %v838
        %v909 = vmul.f32 %v838, %v908
        %v910 = vsub.f32 1.0, %v909
        %v911 = vmul.f32 %v908, %v910
        %v912 = vadd.f32 %v908, %v911
        %vm913 = vweird.f32 %v838
        %vm914 = vweird.f32 %v908
        %vm915 = vmor %vm913, %vm914
        %v916 = vsel %vm915, %v908, %v912
        %v917 = vand.u32 2147483647, %v838
        %vm918 = vcmp.eq.f32.partialorder %v917, 8.507059e+37
        %v919 = vand.u32 %v838, 2147483648
        %v920 = vor.u32 1.1754944e-38, %v919
        %v921 = vsel %vm918, %v920, %v916
        %v922 = vmul.f32 %v817, %v921
        %v923 = vrcp.pop %v841
        %v924 = vmul.f32 %v841, %v923
        %v925 = vsub.f32 1.0, %v924
        %v926 = vmul.f32 %v923, %v925
        %v927 = vadd.f32 %v923, %v926
        %vm928 = vweird.f32 %v841
        %vm929 = vweird.f32 %v923
        %vm930 = vmor %vm928, %vm929
        %v931 = vsel %vm930, %v923, %v927
        %v932 = vand.u32 2147483647, %v841
        %vm933 = vcmp.eq.f32.partialorder %v932, 8.507059e+37
        %v934 = vand.u32 %v841, 2147483648
        %v935 = vor.u32 1.1754944e-38, %v934
        %v936 = vsel %vm933, %v935, %v931
        %v937 = vmul.f32 %v819, %v936
        %v938 = vrcp.pop %v844
        %v939 = vmul.f32 %v844, %v938
        %v940 = vsub.f32 1.0, %v939
        %v941 = vmul.f32 %v938, %v940
        %v942 = vadd.f32 %v938, %v941
        %vm943 = vweird.f32 %v844
        %vm944 = vweird.f32 %v938
        %vm945 = vmor %vm943, %vm944
        %v946 = vsel %vm945, %v938, %v942
        %v947 = vand.u32 2147483647, %v844
        %vm948 = vcmp.eq.f32.partialorder %v947, 8.507059e+37
        %v949 = vand.u32 %v844, 2147483648
        %v950 = vor.u32 1.1754944e-38, %v949
        %v951 = vsel %vm948, %v950, %v946
        %v952 = vmul.f32 %v821, %v951
        %v953 = vrcp.pop %v847
        %v954 = vmul.f32 %v847, %v953
        %v955 = vsub.f32 1.0, %v954
        %v956 = vmul.f32 %v953, %v955
        %v957 = vadd.f32 %v953, %v956
        %vm958 = vweird.f32 %v847
        %vm959 = vweird.f32 %v953
        %vm960 = vmor %vm958, %vm959
        %v961 = vsel %vm960, %v953, %v957
        %v962 = vand.u32 2147483647, %v847
        %vm963 = vcmp.eq.f32.partialorder %v962, 8.507059e+37
        %v964 = vand.u32 %v847, 2147483648
        %v965 = vor.u32 1.1754944e-38, %v964
        %v966 = vsel %vm963, %v965, %v961
        %v967 = vmul.f32 %v823, %v966
        %v969 = vsel %vm775, %v862, 0
        %971 = vmatpush.msra.mxu0 0.0
        %972 = vmatpush.msra.mxu0 0.0
        %973 = vmatpush.msra.mxu0 0.0
        %974 = vmatpush.msra.mxu0 0.0
        %975 = vmatpush.msra.mxu0 0.0
        %976 = vmatpush.msra.mxu0 0.0
        %977 = vmatpush.msra.mxu0 0.0
        %978 = vmatpush.msra.mxu0 0.0
        %979 = vmatpush.msra.mxu0 0.0
        %980 = vmatpush.msra.mxu0 0.0
        %981 = vmatpush.msra.mxu0 0.0
        %982 = vmatpush.msra.mxu0 0.0
        %983 = vmatpush.msra.mxu0 0.0
        %984 = vmatpush.msra.mxu0 0.0
        %985 = vmatpush.msra.mxu0 0.0
        %986 = vmatpush.msra.mxu0 %v419
        %987 = vmatmul.f32.gmra.mxu0 %v969
        %v988 = vpop.f32.mrf.mxu0
        %v989 = vadd.f32 0.0, %v988
        %990 = vdwg.mxu0
        %v992 = vsel %vm775, %v877, 0
        %994 = vmatpush.msra.mxu0 0.0
        %995 = vmatpush.msra.mxu0 0.0
        %996 = vmatpush.msra.mxu0 0.0
        %997 = vmatpush.msra.mxu0 0.0
        %998 = vmatpush.msra.mxu0 0.0
        %999 = vmatpush.msra.mxu0 0.0
        %1000 = vmatpush.msra.mxu0 0.0
        %1001 = vmatpush.msra.mxu0 0.0
        %1002 = vmatpush.msra.mxu0 0.0
        %1003 = vmatpush.msra.mxu0 0.0
        %1004 = vmatpush.msra.mxu0 0.0
        %1005 = vmatpush.msra.mxu0 0.0
        %1006 = vmatpush.msra.mxu0 0.0
        %1007 = vmatpush.msra.mxu0 0.0
        %1008 = vmatpush.msra.mxu0 0.0
        %1009 = vmatpush.msra.mxu0 %v442
        %1010 = vmatmul.f32.gmra.mxu0 %v992
        %v1011 = vpop.f32.mrf.mxu0
        %v1012 = vadd.f32 0.0, %v1011
        %1013 = vdwg.mxu0
        %v1015 = vsel %vm775, %v892, 0
        %1017 = vmatpush.msra.mxu0 0.0
        %1018 = vmatpush.msra.mxu0 0.0
        %1019 = vmatpush.msra.mxu0 0.0
        %1020 = vmatpush.msra.mxu0 0.0
        %1021 = vmatpush.msra.mxu0 0.0
        %1022 = vmatpush.msra.mxu0 0.0
        %1023 = vmatpush.msra.mxu0 0.0
        %1024 = vmatpush.msra.mxu0 0.0
        %1025 = vmatpush.msra.mxu0 0.0
        %1026 = vmatpush.msra.mxu0 0.0
        %1027 = vmatpush.msra.mxu0 0.0
        %1028 = vmatpush.msra.mxu0 0.0
        %1029 = vmatpush.msra.mxu0 0.0
        %1030 = vmatpush.msra.mxu0 0.0
        %1031 = vmatpush.msra.mxu0 0.0
        %1032 = vmatpush.msra.mxu0 %v465
        %1033 = vmatmul.f32.gmra.mxu0 %v1015
        %v1034 = vpop.f32.mrf.mxu0
        %v1035 = vadd.f32 0.0, %v1034
        %1036 = vdwg.mxu0
        %v1038 = vsel %vm775, %v907, 0
        %1040 = vmatpush.msra.mxu0 0.0
        %1041 = vmatpush.msra.mxu0 0.0
        %1042 = vmatpush.msra.mxu0 0.0
        %1043 = vmatpush.msra.mxu0 0.0
        %1044 = vmatpush.msra.mxu0 0.0
        %1045 = vmatpush.msra.mxu0 0.0
        %1046 = vmatpush.msra.mxu0 0.0
        %1047 = vmatpush.msra.mxu0 0.0
        %1048 = vmatpush.msra.mxu0 0.0
        %1049 = vmatpush.msra.mxu0 0.0
        %1050 = vmatpush.msra.mxu0 0.0
        %1051 = vmatpush.msra.mxu0 0.0
        %1052 = vmatpush.msra.mxu0 0.0
        %1053 = vmatpush.msra.mxu0 0.0
        %1054 = vmatpush.msra.mxu0 0.0
        %1055 = vmatpush.msra.mxu0 %v488
        %1056 = vmatmul.f32.gmra.mxu0 %v1038
        %v1057 = vpop.f32.mrf.mxu0
        %v1058 = vadd.f32 0.0, %v1057
        %1059 = vdwg.mxu0
        %v1061 = vsel %vm775, %v922, 0
        %1063 = vmatpush.msra.mxu0 0.0
        %1064 = vmatpush.msra.mxu0 0.0
        %1065 = vmatpush.msra.mxu0 0.0
        %1066 = vmatpush.msra.mxu0 0.0
        %1067 = vmatpush.msra.mxu0 0.0
        %1068 = vmatpush.msra.mxu0 0.0
        %1069 = vmatpush.msra.mxu0 0.0
        %1070 = vmatpush.msra.mxu0 0.0
        %1071 = vmatpush.msra.mxu0 0.0
        %1072 = vmatpush.msra.mxu0 0.0
        %1073 = vmatpush.msra.mxu0 0.0
        %1074 = vmatpush.msra.mxu0 0.0
        %1075 = vmatpush.msra.mxu0 0.0
        %1076 = vmatpush.msra.mxu0 0.0
        %1077 = vmatpush.msra.mxu0 0.0
        %1078 = vmatpush.msra.mxu0 %v511
        %1079 = vmatmul.f32.gmra.mxu0 %v1061
        %v1080 = vpop.f32.mrf.mxu0
        %v1081 = vadd.f32 0.0, %v1080
        %1082 = vdwg.mxu0
        %v1084 = vsel %vm775, %v937, 0
        %1086 = vmatpush.msra.mxu0 0.0
        %1087 = vmatpush.msra.mxu0 0.0
        %1088 = vmatpush.msra.mxu0 0.0
        %1089 = vmatpush.msra.mxu0 0.0
        %1090 = vmatpush.msra.mxu0 0.0
        %1091 = vmatpush.msra.mxu0 0.0
        %1092 = vmatpush.msra.mxu0 0.0
        %1093 = vmatpush.msra.mxu0 0.0
        %1094 = vmatpush.msra.mxu0 0.0
        %1095 = vmatpush.msra.mxu0 0.0
        %1096 = vmatpush.msra.mxu0 0.0
        %1097 = vmatpush.msra.mxu0 0.0
        %1098 = vmatpush.msra.mxu0 0.0
        %1099 = vmatpush.msra.mxu0 0.0
        %1100 = vmatpush.msra.mxu0 0.0
        %1101 = vmatpush.msra.mxu0 %v534
        %1102 = vmatmul.f32.gmra.mxu0 %v1084
        %v1103 = vpop.f32.mrf.mxu0
        %v1104 = vadd.f32 0.0, %v1103
        %1105 = vdwg.mxu0
        %v1107 = vsel %vm775, %v952, 0
        %1109 = vmatpush.msra.mxu0 0.0
        %1110 = vmatpush.msra.mxu0 0.0
        %1111 = vmatpush.msra.mxu0 0.0
        %1112 = vmatpush.msra.mxu0 0.0
        %1113 = vmatpush.msra.mxu0 0.0
        %1114 = vmatpush.msra.mxu0 0.0
        %1115 = vmatpush.msra.mxu0 0.0
        %1116 = vmatpush.msra.mxu0 0.0
        %1117 = vmatpush.msra.mxu0 0.0
        %1118 = vmatpush.msra.mxu0 0.0
        %1119 = vmatpush.msra.mxu0 0.0
        %1120 = vmatpush.msra.mxu0 0.0
        %1121 = vmatpush.msra.mxu0 0.0
        %1122 = vmatpush.msra.mxu0 0.0
        %1123 = vmatpush.msra.mxu0 0.0
        %1124 = vmatpush.msra.mxu0 %v557
        %1125 = vmatmul.f32.gmra.mxu0 %v1107
        %v1126 = vpop.f32.mrf.mxu0
        %v1127 = vadd.f32 0.0, %v1126
        %1128 = vdwg.mxu0
        %v1130 = vsel %vm775, %v967, 0
        %1132 = vmatpush.msra.mxu0 0.0
        %1133 = vmatpush.msra.mxu0 0.0
        %1134 = vmatpush.msra.mxu0 0.0
        %1135 = vmatpush.msra.mxu0 0.0
        %1136 = vmatpush.msra.mxu0 0.0
        %1137 = vmatpush.msra.mxu0 0.0
        %1138 = vmatpush.msra.mxu0 0.0
        %1139 = vmatpush.msra.mxu0 0.0
        %1140 = vmatpush.msra.mxu0 0.0
        %1141 = vmatpush.msra.mxu0 0.0
        %1142 = vmatpush.msra.mxu0 0.0
        %1143 = vmatpush.msra.mxu0 0.0
        %1144 = vmatpush.msra.mxu0 0.0
        %1145 = vmatpush.msra.mxu0 0.0
        %1146 = vmatpush.msra.mxu0 0.0
        %1147 = vmatpush.msra.mxu0 %v580
        %1148 = vmatmul.f32.gmra.mxu0 %v1130
        %v1149 = vpop.f32.mrf.mxu0
        %v1150 = vadd.f32 0.0, %v1149
        %1151 = vdwg.mxu0
        %v1152 = vrot.slane %v1035, 4
        %vm1153 = vcmask 1047556
        %v1154 = vsel %vm1153, %v1152, %v989
        %v1155 = vrot.slane %v989, 4
        %v1156 = vsel %vm1153, %v1035, %v1155
        %v1158 = vunpack.c.l.s4 1983009808
        %v1159 = vunpack.c.0.s8 %v1158
        %v1160 = vperm.slane %v1154, %v1159
        %v1162 = vunpack.c.l.s4 1983009808
        %v1163 = vunpack.c.0.s8 %v1162
        %v1164 = vperm.slane %v1156, %v1163
        %v1165 = vrot.slane %v1058, 4
        %v1166 = vsel %vm1153, %v1165, %v1012
        %v1167 = vrot.slane %v1012, 4
        %v1168 = vsel %vm1153, %v1058, %v1167
        %v1170 = vunpack.c.l.s4 1983009808
        %v1171 = vunpack.c.0.s8 %v1170
        %v1172 = vperm.slane %v1166, %v1171
        %v1174 = vunpack.c.l.s4 1983009808
        %v1175 = vunpack.c.0.s8 %v1174
        %v1176 = vperm.slane %v1168, %v1175
        %v1177 = vrot.slane %v1127, 4
        %v1178 = vsel %vm1153, %v1177, %v1081
        %v1179 = vrot.slane %v1081, 4
        %v1180 = vsel %vm1153, %v1127, %v1179
        %v1182 = vunpack.c.l.s4 1983009808
        %v1183 = vunpack.c.0.s8 %v1182
        %v1184 = vperm.slane %v1178, %v1183
        %v1186 = vunpack.c.l.s4 1983009808
        %v1187 = vunpack.c.0.s8 %v1186
        %v1188 = vperm.slane %v1180, %v1187
        %v1189 = vrot.slane %v1150, 4
        %v1190 = vsel %vm1153, %v1189, %v1104
        %v1191 = vrot.slane %v1104, 4
        %v1192 = vsel %vm1153, %v1150, %v1191
        %v1194 = vunpack.c.l.s4 1983009808
        %v1195 = vunpack.c.0.s8 %v1194
        %v1196 = vperm.slane %v1190, %v1195
        %v1198 = vunpack.c.l.s4 1983009808
        %v1199 = vunpack.c.0.s8 %v1198
        %v1200 = vperm.slane %v1192, %v1199
        %v1201 = vrot.slane %v1172, 4
        %v1202 = vsel %vm1153, %v1201, %v1160
        %v1203 = vrot.slane %v1160, 4
        %v1204 = vsel %vm1153, %v1172, %v1203
        %v1206 = vunpack.c.l.s4 1934713408
        %v1207 = vunpack.c.0.s8 %v1206
        %v1208 = vperm.slane %v1202, %v1207
        %v1210 = vunpack.c.l.s4 1934713408
        %v1211 = vunpack.c.0.s8 %v1210
        %v1212 = vperm.slane %v1204, %v1211
        %v1213 = vrot.slane %v1176, 4
        %v1214 = vsel %vm1153, %v1213, %v1164
        %v1215 = vrot.slane %v1164, 4
        %v1216 = vsel %vm1153, %v1176, %v1215
        %v1218 = vunpack.c.l.s4 1934713408
        %v1219 = vunpack.c.0.s8 %v1218
        %v1220 = vperm.slane %v1214, %v1219
        %v1222 = vunpack.c.l.s4 1934713408
        %v1223 = vunpack.c.0.s8 %v1222
        %v1224 = vperm.slane %v1216, %v1223
        %v1225 = vrot.slane %v1196, 4
        %v1226 = vsel %vm1153, %v1225, %v1184
        %v1227 = vrot.slane %v1184, 4
        %v1228 = vsel %vm1153, %v1196, %v1227
        %v1230 = vunpack.c.l.s4 1934713408
        %v1231 = vunpack.c.0.s8 %v1230
        %v1232 = vperm.slane %v1226, %v1231
        %v1234 = vunpack.c.l.s4 1934713408
        %v1235 = vunpack.c.0.s8 %v1234
        %v1236 = vperm.slane %v1228, %v1235
        %v1237 = vrot.slane %v1200, 4
        %v1238 = vsel %vm1153, %v1237, %v1188
        %v1239 = vrot.slane %v1188, 4
        %v1240 = vsel %vm1153, %v1200, %v1239
        %v1242 = vunpack.c.l.s4 1934713408
        %v1243 = vunpack.c.0.s8 %v1242
        %v1244 = vperm.slane %v1238, %v1243
        %v1246 = vunpack.c.l.s4 1934713408
        %v1247 = vunpack.c.0.s8 %v1246
        %v1248 = vperm.slane %v1240, %v1247
        %v1249 = vrot.slane %v1232, 4
        %v1250 = vsel %vm1153, %v1249, %v1208
        %v1251 = vrot.slane %v1208, 4
        %v1252 = vsel %vm1153, %v1232, %v1251
        %v1253 = vrot.slane %v1236, 4
        %v1254 = vsel %vm1153, %v1253, %v1212
        %v1255 = vrot.slane %v1212, 4
        %v1256 = vsel %vm1153, %v1236, %v1255
        %v1257 = vrot.slane %v1244, 4
        %v1258 = vsel %vm1153, %v1257, %v1220
        %v1259 = vrot.slane %v1220, 4
        %v1260 = vsel %vm1153, %v1244, %v1259
        %v1261 = vrot.slane %v1248, 4
        %v1262 = vsel %vm1153, %v1261, %v1224
        %v1263 = vrot.slane %v1224, 4
        %v1264 = vsel %vm1153, %v1248, %v1263
        %1266 = vrot.lane.b32.xlu0 %v1252, 4
        %v1267 = vpop.permute.xlu0 %1266
        %1270 = vrot.lane.b32.xlu0 %v1254, 8
        %v1271 = vpop.permute.xlu0 %1270
        %1274 = vrot.lane.b32.xlu0 %v1256, 12
        %v1275 = vpop.permute.xlu0 %1274
        %1278 = vrot.lane.b32.xlu0 %v1258, 16
        %v1279 = vpop.permute.xlu0 %1278
        %1282 = vrot.lane.b32.xlu0 %v1260, 20
        %v1283 = vpop.permute.xlu0 %1282
        %1286 = vrot.lane.b32.xlu0 %v1262, 24
        %v1287 = vpop.permute.xlu0 %1286
        %1290 = vrot.lane.b32.xlu0 %v1264, 28
        %v1291 = vpop.permute.xlu0 %1290
        %v1293 = vsel %vm582, %v1250, %v1267
        %v1294 = vsel %vm775, %v1293, %v1271
        %vm1295 = vcmask 97280
        %v1296 = vsel %vm1295, %v1294, %v1275
        %vm1297 = vcmask 130048
        %v1298 = vsel %vm1297, %v1296, %v1279
        %vm1299 = vcmask 162816
        %v1300 = vsel %vm1299, %v1298, %v1283
        %vm1301 = vcmask 195584
        %v1302 = vsel %vm1301, %v1300, %v1287
        %vm1303 = vcmask 228352
        %v1304 = vsel %vm1303, %v1302, %v1291
        %v1305 = vld [vmem:[%s3] sm:$0xff]
        %v1306 = vld [vmem:[%s3 + $0x8] sm:$0xff]
        %v1307 = vld [vmem:[%s3 + $0x10] sm:$0xff]
        %v1308 = vld [vmem:[%s3 + $0x18] sm:$0xff]
        %v1310 = vsel %vm202, %v1304, 0
        %v1313 = vsel %vm202, %v1305, 0
        %v1316 = vsel %vm202, %v1306, 0
        %v1319 = vsel %vm202, %v1307, 0
        %v1322 = vsel %vm202, %v1308, 0
        %1324 = vmatpush.xpose.msra.mxu0 0.0
        %1325 = vmatpush.xpose.msra.mxu0 0.0
        %1326 = vmatpush.xpose.msra.mxu0 0.0
        %1327 = vmatpush.xpose.msra.mxu0 0.0
        %1328 = vmatpush.xpose.msra.mxu0 0.0
        %1329 = vmatpush.xpose.msra.mxu0 0.0
        %1330 = vmatpush.xpose.msra.mxu0 0.0
        %1331 = vmatpush.xpose.msra.mxu0 0.0
        %1332 = vmatpush.xpose.msra.mxu0 0.0
        %1333 = vmatpush.xpose.msra.mxu0 0.0
        %1334 = vmatpush.xpose.msra.mxu0 0.0
        %1335 = vmatpush.xpose.msra.mxu0 0.0
        %1336 = vmatpush.xpose.msra.mxu0 %v1322
        %1337 = vmatpush.xpose.msra.mxu0 %v1319
        %1338 = vmatpush.xpose.msra.mxu0 %v1316
        %1339 = vmatpush.xpose.msra.mxu0 %v1313
        %1340 = vmatmul.f32.gmra.mxu0 %v1310
        %v1341 = vpop.f32.mrf.mxu0
        %v1342 = vadd.f32 0.0, %v1341
        %1343 = vdwg.mxu0
        %1344 = vst.msk [vmem:[%s188] sm:$0xff] %vm202, %v1342
        %s1345 = sand.u32 %s115, 1
        %s1346 = scalar_lea.sflag [#allocation3], %s1345
        %s1347 = sand.u32 %s115, 1
        %s1348 = smul.addr %s1347, 8
        %s1349 = scalar_lea.vmem [#allocation2], %s1348
        // Predicated region
        $region37: #{self_attention_forward.1} parent=35 // pred_check
          %p1350 = pneg %p125
        $region38: #{self_attention_forward.1} parent=35 // pred_check_branch
          %1352 = sbr.rel (%p1350) target = $region40
        $region39: #{self_attention_forward.1} parent=35 // pred_region
          %1354 = vsyncadd %s1346, 0
          %s1355 = smul.addr %s18, 8
          %s1356 = scalar_lea.hbm %s4, %s1355
          %s1358 = sshll.u32 %s1349, 4
          %s1359 = int_to_ptr.vmem [resolvable:$true] %s1358
          %s1360 = sshll.u32 %s1356, 4
          %s1361 = int_to_ptr.hbm [resolvable:$true] %s1360
          %1363 = dma.vmem_to_hbm [thread:$0]  %s1359, 128, %s1361, %s1346
        $region40: #{self_attention_forward.1} parent=35 // pred_fallthru
          _
      $region36: #{self_attention_forward.1} parent=5 // pred_fallthru
        _
      %p1364 = scmp.le.s32.totalorder 2, %s13
      // Predicated region
      $region41: #{self_attention_forward.1} parent=5 // pred_check
        %p1365 = pneg %p1364
      $region42: #{self_attention_forward.1} parent=5 // pred_check_branch
        %1367 = sbr.rel (%p1365) target = $region44
      $region43: #{self_attention_forward.1} parent=5 // pred_region
        %s1368 = ssub.s32 %s13, 2
        // Predicated region
        $region45: #{self_attention_forward.1} parent=43 // pred_check
          %p1369 = pneg %p131
        $region46: #{self_attention_forward.1} parent=43 // pred_check_branch
          %1371 = sbr.rel (%p1369) target = $region48
        $region47: #{self_attention_forward.1} parent=43 // pred_region
          %s1372 = sand.u32 %s116, 1
          %s1373 = scalar_lea.sflag [#allocation3], %s1372
          %s1374 = sand.u32 %s116, 1
          %s1375 = smul.addr %s1374, 8
          %s1376 = scalar_lea.vmem [#allocation2], %s1375
          %1378 = dma.done %s1373, 128
        $region48: #{self_attention_forward.1} parent=43 // pred_fallthru
          _
      $region44: #{self_attention_forward.1} parent=5 // pred_fallthru
        _
    $region6: #{self_attention_forward.1} parent=1 // loop_footer
      %s17 = sadd.s32 1, %s13
    $region7: #{self_attention_forward.1} parent=1 // loop_footer_branch
      %12 = sbr.rel target = $region3
    $region8: #{self_attention_forward.1} parent=1 // loop_exit
      _
    %1379 = vsyncpa [#allocation3], 1
    %s1380 = scalar_lea.sflag [#allocation3], 1
    %1381 = vsyncpa %s1380, 1

</llo_original>
